<compile_context>
chip_gen: v6e
topology: v6e:2x2x1
jax: 0.10.0
libtpu: 0.0.40
codegen_flags: <defaults>
</compile_context>

<pallas_src>
import functools
import math

import jax
import jax.numpy as jnp
from jax import lax
from jax.experimental import pallas as pl
from jax.experimental.pallas import tpu as pltpu

NEG_MASK_F32 = float(jnp.finfo(jnp.float32).min)   # HF's torch.finfo(...).min
M_INIT = -1e30                                     # finite => no inf-inf NaN


# ---------------------------------------------------------------------------
# Kernel 1: fused QKV projection with RoPE (+ sm_scale on Q) in the epilogue
# ---------------------------------------------------------------------------
def _qkv_rope_kernel(x_ref, w_ref, cos_ref, sin_ref, o_ref, acc_ref, *,
                     num_heads, sm_scale):
    j = pl.program_id(1)        # output column block == (qkv slot, head)
    k = pl.program_id(2)

    @pl.when(k == 0)
    def _():
        acc_ref[...] = jnp.zeros_like(acc_ref)

    acc_ref[...] += jnp.dot(x_ref[...], w_ref[...],
                            preferred_element_type=jnp.float32)

    @pl.when(k == pl.num_programs(2) - 1)
    def _():
        acc = acc_ref[...]                              # (tm, head_dim) f32

        # Q / K column blocks get RoPE; Q additionally gets sm_scale folded in.
        @pl.when(j < 2 * num_heads)
        def _():
            cos = cos_ref[...]                          # (tm, head_dim) f32
            sin = sin_ref[...]
            d = acc.shape[-1]
            x1 = acc[:, : d // 2]
            x2 = acc[:, d // 2:]
            rot = jnp.concatenate([-x2, x1], axis=-1)   # rotate_half
            roped = acc * cos + rot * sin
            scale = jnp.where(j < num_heads, sm_scale, 1.0)
            o_ref[...] = (roped * scale).astype(o_ref.dtype)

        @pl.when(j >= 2 * num_heads)
        def _():
            o_ref[...] = acc.astype(o_ref.dtype)


def qkv_rope_projection(x2d, wqkv_t, cos, sin, *, seq_len, num_heads,
                        head_dim, sm_scale, tm=256, tk=256):
    """(M, H) @ (H, 3H) with per-head RoPE applied to the Q/K outputs."""
    M, H = x2d.shape
    N = wqkv_t.shape[1]
    assert N == 3 * num_heads * head_dim and head_dim % 2 == 0
    tm = min(tm, seq_len)
    tk = min(tk, H)
    assert seq_len % tm == 0 and H % tk == 0 and M % tm == 0
    tn = head_dim                      # one head-slice per output column tile
    npos = seq_len // tm

    kernel = functools.partial(_qkv_rope_kernel, num_heads=num_heads,
                               sm_scale=sm_scale)
    return pl.pallas_call(
        kernel,
        out_shape=jax.ShapeDtypeStruct((M, N), x2d.dtype),
        grid_spec=pltpu.PrefetchScalarGridSpec(
            num_scalar_prefetch=0,
            grid=(M // tm, N // tn, H // tk),
            in_specs=[
                pl.BlockSpec((tm, tk), lambda i, j, k: (i, k)),            # x
                pl.BlockSpec((tk, tn), lambda i, j, k: (k, j)),            # w
                pl.BlockSpec((tm, head_dim), lambda i, j, k: (i % npos, 0)),  # cos
                pl.BlockSpec((tm, head_dim), lambda i, j, k: (i % npos, 0)),  # sin
            ],
            out_specs=pl.BlockSpec((tm, tn), lambda i, j, k: (i, j)),
            scratch_shapes=[pltpu.VMEM((tm, tn), jnp.float32)],
        ),
        compiler_params=pltpu.CompilerParams(
            dimension_semantics=("parallel", "parallel", "arbitrary")),
    )(x2d, wqkv_t, cos, sin)


# ---------------------------------------------------------------------------
# Kernel 2: causal flash attention, heads read in place from the QKV buffer
# ---------------------------------------------------------------------------
def _flash_attn_kernel(q_ref, k_ref, v_ref, o_ref, m_sc, l_sc, acc_sc, *,
                       tq, tkv, causal):
    qi = pl.program_id(2)
    ki = pl.program_id(3)

    @pl.when(ki == 0)
    def _():
        m_sc[...] = jnp.full_like(m_sc, M_INIT)
        l_sc[...] = jnp.zeros_like(l_sc)
        acc_sc[...] = jnp.zeros_like(acc_sc)

    def body():
        q = q_ref[...]                                  # (tq, D), roped+scaled
        k = k_ref[...]                                  # (tkv, D), roped
        s = lax.dot_general(q, k, (((1,), (1,)), ((), ())),
                            preferred_element_type=jnp.float32)   # (tq, tkv)
        if causal:
            row = qi * tq + lax.broadcasted_iota(jnp.int32, (tq, tkv), 0)
            col = ki * tkv + lax.broadcasted_iota(jnp.int32, (tq, tkv), 1)
            s = jnp.where(row >= col, s, NEG_MASK_F32)

        m_prev = m_sc[...]
        m_new = jnp.maximum(m_prev, s.max(axis=-1, keepdims=True))
        alpha = jnp.exp(m_prev - m_new)
        p = jnp.exp(s - m_new)
        l_sc[...] = alpha * l_sc[...] + p.sum(axis=-1, keepdims=True)
        acc_sc[...] = alpha * acc_sc[...] + jnp.dot(
            p.astype(v_ref.dtype), v_ref[...],
            preferred_element_type=jnp.float32)
        m_sc[...] = m_new

    if causal:
        # Skip kv tiles that lie entirely in the future (fully masked).
        @pl.when(ki * tkv <= qi * tq + tq - 1)
        def _():
            body()
    else:
        body()

    @pl.when(ki == pl.num_programs(3) - 1)
    def _():
        o_ref[...] = (acc_sc[...] / l_sc[...]).astype(o_ref.dtype)


def flash_attention(qkv, *, batch, seq_len, num_heads, head_dim, causal=True,
                    tq=128, tkv=256):
    """qkv: (B*S, 3*H), columns [Q heads | K heads | V heads].
    Returns context in (B*S, H) layout (head-major columns)."""
    M, N = qkv.shape
    H = num_heads * head_dim
    assert M == batch * seq_len and N == 3 * H
    tq = min(tq, seq_len)
    tkv = min(tkv, seq_len)
    assert seq_len % tq == 0 and seq_len % tkv == 0
    nq = seq_len // tq
    nk = seq_len // tkv

    def kv_block(qi, ki):
        if causal:
            # Clamp so skipped (fully-masked) steps re-reference the previous
            # block and trigger no new DMA.
            return jnp.minimum(ki, (qi * tq + tq - 1) // tkv)
        return ki

    q_map = lambda b, h, qi, ki: (b * nq + qi, h)
    k_map = lambda b, h, qi, ki: (b * nk + kv_block(qi, ki), num_heads + h)
    v_map = lambda b, h, qi, ki: (b * nk + kv_block(qi, ki), 2 * num_heads + h)
    o_map = lambda b, h, qi, ki: (b * nq + qi, h)

    kernel = functools.partial(_flash_attn_kernel, tq=tq, tkv=tkv,
                               causal=causal)
    return pl.pallas_call(
        kernel,
        out_shape=jax.ShapeDtypeStruct((M, H), qkv.dtype),
        grid_spec=pltpu.PrefetchScalarGridSpec(
            num_scalar_prefetch=0,
            grid=(batch, num_heads, nq, nk),
            in_specs=[
                pl.BlockSpec((tq, head_dim), q_map),
                pl.BlockSpec((tkv, head_dim), k_map),
                pl.BlockSpec((tkv, head_dim), v_map),
            ],
            out_specs=pl.BlockSpec((tq, head_dim), o_map),
            scratch_shapes=[pltpu.VMEM((tq, 1), jnp.float32),     # running max
                            pltpu.VMEM((tq, 1), jnp.float32),     # running sum
                            pltpu.VMEM((tq, head_dim), jnp.float32)],  # acc
        ),
        compiler_params=pltpu.CompilerParams(
            dimension_semantics=("parallel", "parallel", "parallel",
                                 "arbitrary")),
    )(qkv, qkv, qkv)


# ---------------------------------------------------------------------------
# Kernel 3: plain tiled matmul (O projection)
# ---------------------------------------------------------------------------
def _matmul_kernel(x_ref, w_ref, o_ref, acc_ref):
    @pl.when(pl.program_id(2) == 0)
    def _():
        acc_ref[...] = jnp.zeros_like(acc_ref)

    acc_ref[...] += jnp.dot(x_ref[...], w_ref[...],
                            preferred_element_type=jnp.float32)

    @pl.when(pl.program_id(2) == pl.num_programs(2) - 1)
    def _():
        o_ref[...] = acc_ref[...].astype(o_ref.dtype)


def matmul(x, w, *, tm=256, tn=256, tk=256):
    """(M, K) @ (K, N) -> (M, N); MXU-tiled with f32 accumulation."""
    M, K = x.shape
    K2, N = w.shape
    assert K == K2
    tm, tn, tk = min(tm, M), min(tn, N), min(tk, K)
    pad_m = (-M) % tm
    if pad_m:
        x = jnp.pad(x, ((0, pad_m), (0, 0)))
    Mp = M + pad_m
    assert N % tn == 0 and K % tk == 0

    out = pl.pallas_call(
        _matmul_kernel,
        out_shape=jax.ShapeDtypeStruct((Mp, N), x.dtype),
        grid_spec=pltpu.PrefetchScalarGridSpec(
            num_scalar_prefetch=0,
            grid=(Mp // tm, N // tn, K // tk),
            in_specs=[
                pl.BlockSpec((tm, tk), lambda i, j, k: (i, k)),
                pl.BlockSpec((tk, tn), lambda i, j, k: (k, j)),
            ],
            out_specs=pl.BlockSpec((tm, tn), lambda i, j, k: (i, j)),
            scratch_shapes=[pltpu.VMEM((tm, tn), jnp.float32)],
        ),
        compiler_params=pltpu.CompilerParams(
            dimension_semantics=("parallel", "parallel", "arbitrary")),
    )(x, w)
    return out[:M] if pad_m else out


# ---------------------------------------------------------------------------
# Wrapper: LlamaAttention.forward (no KV cache / LoRA / output_attentions)
# ---------------------------------------------------------------------------
def rotary_tables(seq_len, dim, base=10000.0):
    inv_freq = 1.0 / (base ** (jnp.arange(0, dim, 2, dtype=jnp.float32) / dim))
    t = jnp.arange(seq_len, dtype=jnp.float32)
    freqs = jnp.einsum("i,j->ij", t, inv_freq)
    emb = jnp.concatenate([freqs, freqs], axis=-1)      # (S, dim)
    return jnp.cos(emb), jnp.sin(emb)                   # keep tables in f32


def fuse_qkv_weights(wq_t, wk_t, wv_t):
    """Fuse (in,out) projection weights once, outside the forward path."""
    return jnp.concatenate([wq_t, wk_t, wv_t], axis=1)   # (H, 3H)


def llama_attention(hidden_states, wqkv_t, wo_t, *, num_heads, causal=True,
                    tm=256, tn=256, tk=256, tq=128, tkv=256):
    """hidden_states: (B, S, H). wqkv_t: (H, 3H) fused weight (in, out layout).
    wo_t: (H, H). Returns (attn_output, None, None, [])."""
    B, S, H = hidden_states.shape
    head_dim = H // num_heads
    M = B * S
    sm_scale = 1.0 / math.sqrt(head_dim)

    x2d = hidden_states.reshape(M, H)
    cos, sin = rotary_tables(S, head_dim)

    # Fused QKV projection with RoPE + sm_scale applied once in the epilogue.
    qkv = qkv_rope_projection(x2d, wqkv_t, cos, sin, seq_len=S,
                              num_heads=num_heads, head_dim=head_dim,
                              sm_scale=sm_scale, tm=tm, tk=tk)   # (M, 3H)

    # Flash attention reads heads straight out of the (M, 3H) buffer and
    # writes the context in (M, H) layout (no head-split transposes).
    ctx = flash_attention(qkv, batch=B, seq_len=S, num_heads=num_heads,
                          head_dim=head_dim, causal=causal, tq=tq, tkv=tkv)

    out2d = matmul(ctx, wo_t, tm=tm, tn=tn, tk=tk)
    attn_output = out2d.reshape(B, S, H)

    # (attn_output, attn_weights, past_key_value, router_logits)
    return attn_output, None, None, []


# ---------------------------------------------------------------------------
# Pure-JAX reference mirroring the PyTorch forward (explicit causal mask)
# ---------------------------------------------------------------------------
def reference_attention(hidden_states, wq_t, wk_t, wv_t, wo_t,
                        attention_mask, num_heads):
    B, S, H = hidden_states.shape
    hd = H // num_heads
    P = jax.lax.Precision.HIGHEST

    q = jnp.einsum("bsh,hd->bsd", hidden_states, wq_t, precision=P)
    k = jnp.einsum("bsh,hd->bsd", hidden_states, wk_t, precision=P)
    v = jnp.einsum("bsh,hd->bsd", hidden_states, wv_t, precision=P)

    def sh(t):
        return t.reshape(B, S, num_heads, hd).transpose(0, 2, 1, 3)

    q, k, v = sh(q), sh(k), sh(v)
    cos, sin = rotary_tables(S, hd)
    cos, sin = cos[None, None], sin[None, None]

    def rot_half(x):
        x1, x2 = x[..., :hd // 2], x[..., hd // 2:]
        return jnp.concatenate([-x2, x1], axis=-1)

    q = q * cos + rot_half(q) * sin
    k = k * cos + rot_half(k) * sin

    s = jnp.einsum("bhqd,bhkd->bhqk", q, k, precision=P) / math.sqrt(hd)
    if attention_mask is not None:
        s = s + attention_mask
        s = jnp.maximum(s, jnp.finfo(jnp.float32).min)
    p = jax.nn.softmax(s.astype(jnp.float32), axis=-1).astype(q.dtype)
    ctx = jnp.einsum("bhqk,bhkd->bhqd", p, v, precision=P)
    ctx = ctx.transpose(0, 2, 1, 3).reshape(B, S, H)
    return jnp.einsum("bsh,hd->bsd", ctx, wo_t, precision=P)


if __name__ == "__main__":
    batch, seq = 2, 128
    hidden_size = 256
    num_heads = 2
    head_dim = hidden_size // num_heads    # 128 (lane-friendly)
    dtype = jnp.float32                    # module runs under autocast(enabled=False)

    key = jax.random.PRNGKey(0)
    kx, kq, kk, kv, ko = jax.random.split(key, 5)

    x = jax.random.normal(kx, (batch, seq, hidden_size), dtype=dtype)

    # nn.Linear stores (out_features, in_features); kernels consume (in, out).
    scale = 1.0 / math.sqrt(hidden_size)
    wq = jax.random.normal(kq, (hidden_size, hidden_size), dtype) * scale
    wk = jax.random.normal(kk, (hidden_size, hidden_size), dtype) * scale
    wv = jax.random.normal(kv, (hidden_size, hidden_size), dtype) * scale
    wo = jax.random.normal(ko, (hidden_size, hidden_size), dtype) * scale
    wq_t, wk_t, wv_t, wo_t = wq.T, wk.T, wv.T, wo.T

    # Fused QKV weight built once, outside the forward path.
    wqkv_t = fuse_qkv_weights(wq_t, wk_t, wv_t)

    out, attn_w, past_kv, router_logits = llama_attention(
        x, wqkv_t, wo_t, num_heads=num_heads, causal=True)
    out = jax.block_until_ready(out)
    assert out.shape == (batch, seq, hidden_size)

    # Reference uses the equivalent materialized HF-style causal mask.
    neg = jnp.finfo(jnp.float32).min
    causal_mask = jnp.triu(jnp.full((seq, seq), neg, dtype=jnp.float32), k=1)
    attention_mask = jnp.broadcast_to(causal_mask[None, None],
                                      (batch, 1, seq, seq))
    ref = reference_attention(x, wq_t, wk_t, wv_t, wo_t,
                              attention_mask, num_heads)

    max_err = jnp.max(jnp.abs(out - ref))
    assert jnp.allclose(out, ref, atol=1e-2, rtol=1e-2), (
        f"mismatch vs reference, max abs err = {max_err}")

    print("KERNEL_OK")
</pallas_src>

<mosaic_0001>
module attributes {stable_mosaic.version = 11 : i64} {
  func.func @_qkv_rope_kernel(%arg0: i32, %arg1: i32, %arg2: i32, %arg3: memref<128x256xf32, #tpu.memory_space<vmem>>, %arg4: memref<256x128xf32, #tpu.memory_space<vmem>>, %arg5: memref<128x128xf32, #tpu.memory_space<vmem>>, %arg6: memref<128x128xf32, #tpu.memory_space<vmem>>, %arg7: memref<128x128xf32, #tpu.memory_space<vmem>>, %arg8: memref<128x128xf32, #tpu.memory_space<vmem>>) attributes {dimension_semantics = [#tpu.dimension_semantics<parallel>, #tpu.dimension_semantics<parallel>, #tpu.dimension_semantics<arbitrary>], iteration_bounds = array<i64: 2, 6, 1>, scalar_prefetch = 0 : i64, scratch_operands = 1 : i64, tpu.core_type = #tpu.core_type<tc>, window_params = [{transform_indices = @transform_0, window_bounds = array<i64: 128, 256>}, {transform_indices = @transform_1, window_bounds = array<i64: 256, 128>}, {transform_indices = @transform_2, window_bounds = array<i64: 128, 128>}, {transform_indices = @transform_3, window_bounds = array<i64: 128, 128>}, {transform_indices = @transform_4, window_bounds = array<i64: 128, 128>}]} {
    %c0_i32 = arith.constant 0 : i32
    %0 = arith.cmpi eq, %arg2, %c0_i32 : i32
    %1 = arith.extui %0 : i1 to i32
    %c0_i32_0 = arith.constant 0 : i32
    %2 = arith.cmpi ne, %1, %c0_i32_0 : i32
    scf.if %2 {
      %cst_10 = arith.constant 0.000000e+00 : f32
      %12 = vector.broadcast %cst_10 : f32 to vector<128x128xf32>
      %c0_11 = arith.constant 0 : index
      %c0_12 = arith.constant 0 : index
      %13 = vector.load %arg8[%c0_11, %c0_12] : memref<128x128xf32, #tpu.memory_space<vmem>>, vector<128x128xf32>
      tpu.vector_store %arg8[%c0_11, %c0_12], %12 {strides = array<i32>} : memref<128x128xf32, #tpu.memory_space<vmem>>, vector<128x128xf32>,
    } else {
    }
    %c0 = arith.constant 0 : index
    %c0_1 = arith.constant 0 : index
    %3 = vector.load %arg8[%c0, %c0_1] : memref<128x128xf32, #tpu.memory_space<vmem>>, vector<128x128xf32>
    %c0_2 = arith.constant 0 : index
    %c0_3 = arith.constant 0 : index
    %4 = vector.load %arg3[%c0_2, %c0_3] : memref<128x256xf32, #tpu.memory_space<vmem>>, vector<128x256xf32>
    %c0_4 = arith.constant 0 : index
    %c0_5 = arith.constant 0 : index
    %5 = vector.load %arg4[%c0_4, %c0_5] : memref<256x128xf32, #tpu.memory_space<vmem>>, vector<256x128xf32>
    %cst = arith.constant dense<0.000000e+00> : vector<128x128xf32>
    %6 = tpu.matmul %4, %5, %cst {dimension_numbers = #tpu.dot_dimension_numbers<[1], [0], [0], [1], [0, 0, 1, 1], [], []>} : vector<128x256xf32>, vector<256x128xf32>, vector<128x128xf32> -> vector<128x128xf32>
    %7 = arith.addf %3, %6 : vector<128x128xf32>
    %c0_6 = arith.constant 0 : index
    %c0_7 = arith.constant 0 : index
    %8 = vector.load %arg8[%c0_6, %c0_7] : memref<128x128xf32, #tpu.memory_space<vmem>>, vector<128x128xf32>
    tpu.vector_store %arg8[%c0_6, %c0_7], %7 {strides = array<i32>} : memref<128x128xf32, #tpu.memory_space<vmem>>, vector<128x128xf32>,
    %c0_i32_8 = arith.constant 0 : i32
    %9 = arith.cmpi eq, %arg2, %c0_i32_8 : i32
    %10 = arith.extui %9 : i1 to i32
    %c0_i32_9 = arith.constant 0 : i32
    %11 = arith.cmpi ne, %10, %c0_i32_9 : i32
    scf.if %11 {
      %c0_10 = arith.constant 0 : index
      %c0_11 = arith.constant 0 : index
      %12 = vector.load %arg8[%c0_10, %c0_11] : memref<128x128xf32, #tpu.memory_space<vmem>>, vector<128x128xf32>
      %c4_i32 = arith.constant 4 : i32
      %13 = arith.cmpi slt, %arg1, %c4_i32 : i32
      %14 = arith.extui %13 : i1 to i32
      %c0_i32_12 = arith.constant 0 : i32
      %15 = arith.cmpi ne, %14, %c0_i32_12 : i32
      scf.if %15 {
        %c0_15 = arith.constant 0 : index
        %c0_16 = arith.constant 0 : index
        %19 = vector.load %arg5[%c0_15, %c0_16] : memref<128x128xf32, #tpu.memory_space<vmem>>, vector<128x128xf32>
        %c0_17 = arith.constant 0 : index
        %c0_18 = arith.constant 0 : index
        %20 = vector.load %arg6[%c0_17, %c0_18] : memref<128x128xf32, #tpu.memory_space<vmem>>, vector<128x128xf32>
        %21 = vector.extract_strided_slice %12 {offsets = [0, 0], sizes = [128, 64], strides = [1, 1]} : vector<128x128xf32> to vector<128x64xf32>
        %22 = vector.extract_strided_slice %12 {offsets = [0, 64], sizes = [128, 64], strides = [1, 1]} : vector<128x128xf32> to vector<128x64xf32>
        %cst_19 = arith.constant 0.000000e+00 : f32
        %23 = vector.broadcast %cst_19 : f32 to vector<128x64xf32>
        %24 = arith.subf %23, %22 : vector<128x64xf32>
        %25 = tpu.concatenate %24, %21 in 1 : vector<128x64xf32>, vector<128x64xf32> -> vector<128x128xf32>
        %26 = arith.mulf %12, %19 : vector<128x128xf32>
        %27 = arith.mulf %25, %20 : vector<128x128xf32>
        %28 = arith.addf %26, %27 : vector<128x128xf32>
        %c2_i32 = arith.constant 2 : i32
        %29 = arith.cmpi slt, %arg1, %c2_i32 : i32
        %cst_20 = arith.constant 0.0883883461 : f32
        %cst_21 = arith.constant 1.000000e+00 : f32
        %30 = arith.select %29, %cst_20, %cst_21 : f32
        %31 = vector.broadcast %30 : f32 to vector<128x128xf32>
        %32 = arith.mulf %28, %31 : vector<128x128xf32>
        %c0_22 = arith.constant 0 : index
        %c0_23 = arith.constant 0 : index
        %33 = vector.load %arg7[%c0_22, %c0_23] : memref<128x128xf32, #tpu.memory_space<vmem>>, vector<128x128xf32>
        tpu.vector_store %arg7[%c0_22, %c0_23], %32 {strides = array<i32>} : memref<128x128xf32, #tpu.memory_space<vmem>>, vector<128x128xf32>,
      } else {
      }
      %c4_i32_13 = arith.constant 4 : i32
      %16 = arith.cmpi sge, %arg1, %c4_i32_13 : i32
      %17 = arith.extui %16 : i1 to i32
      %c0_i32_14 = arith.constant 0 : i32
      %18 = arith.cmpi ne, %17, %c0_i32_14 : i32
      scf.if %18 {
        %c0_15 = arith.constant 0 : index
        %c0_16 = arith.constant 0 : index
        %19 = vector.load %arg7[%c0_15, %c0_16] : memref<128x128xf32, #tpu.memory_space<vmem>>, vector<128x128xf32>
        tpu.vector_store %arg7[%c0_15, %c0_16], %12 {strides = array<i32>} : memref<128x128xf32, #tpu.memory_space<vmem>>, vector<128x128xf32>,
      } else {
      }
    } else {
    }
    return
  }
  func.func @transform_0(%arg0: i32, %arg1: i32, %arg2: i32) -> (i32, i32) {
    %c0_i32 = arith.constant 0 : i32
    return %arg0, %arg2 : i32, i32
  }
  func.func @transform_1(%arg0: i32, %arg1: i32, %arg2: i32) -> (i32, i32) {
    %c0_i32 = arith.constant 0 : i32
    return %arg2, %arg1 : i32, i32
  }
  func.func @transform_2(%arg0: i32, %arg1: i32, %arg2: i32) -> (i32, i32) {
    %c1_i32 = arith.constant 1 : i32
    %c0_i32 = arith.constant 0 : i32
    %0 = arith.cmpi eq, %c1_i32, %c0_i32 : i32
    %c1_i32_0 = arith.constant 1 : i32
    %1 = arith.select %0, %c1_i32_0, %c1_i32 : i32
    %2 = arith.remsi %arg0, %1 : i32
    %c0_i32_1 = arith.constant 0 : i32
    %3 = arith.cmpi ne, %2, %c0_i32_1 : i32
    %c0_i32_2 = arith.constant 0 : i32
    %4 = arith.cmpi slt, %2, %c0_i32_2 : i32
    %c0_i32_3 = arith.constant 0 : i32
    %5 = arith.cmpi slt, %1, %c0_i32_3 : i32
    %6 = arith.xori %4, %5 : i1
    %7 = arith.andi %6, %3 : i1
    %8 = arith.addi %2, %1 : i32
    %9 = arith.select %7, %8, %2 : i32
    %c0_i32_4 = arith.constant 0 : i32
    %c0_i32_5 = arith.constant 0 : i32
    return %9, %c0_i32_4 : i32, i32
  }
  func.func @transform_3(%arg0: i32, %arg1: i32, %arg2: i32) -> (i32, i32) {
    %c1_i32 = arith.constant 1 : i32
    %c0_i32 = arith.constant 0 : i32
    %0 = arith.cmpi eq, %c1_i32, %c0_i32 : i32
    %c1_i32_0 = arith.constant 1 : i32
    %1 = arith.select %0, %c1_i32_0, %c1_i32 : i32
    %2 = arith.remsi %arg0, %1 : i32
    %c0_i32_1 = arith.constant 0 : i32
    %3 = arith.cmpi ne, %2, %c0_i32_1 : i32
    %c0_i32_2 = arith.constant 0 : i32
    %4 = arith.cmpi slt, %2, %c0_i32_2 : i32
    %c0_i32_3 = arith.constant 0 : i32
    %5 = arith.cmpi slt, %1, %c0_i32_3 : i32
    %6 = arith.xori %4, %5 : i1
    %7 = arith.andi %6, %3 : i1
    %8 = arith.addi %2, %1 : i32
    %9 = arith.select %7, %8, %2 : i32
    %c0_i32_4 = arith.constant 0 : i32
    %c0_i32_5 = arith.constant 0 : i32
    return %9, %c0_i32_4 : i32, i32
  }
  func.func @transform_4(%arg0: i32, %arg1: i32, %arg2: i32) -> (i32, i32) {
    %c0_i32 = arith.constant 0 : i32
    return %arg0, %arg1 : i32, i32
  }
}

</mosaic_0001>

<llo_original>
// kernel: tpu_custom_call.1
$region0: #{tpu_custom_call.1}
  #allocation0 [shape = 'u32[]', space=smem, size = 0x4, offset = 0x4, fixed_abs, tag = 'smem constant byte address 0x4 - core index']
  #allocation1 [shape = 'u32[144,128]{1,0:T(1,128)}', space=vmem, size = 0x12000, scoped, tag = 'internal scratch']
  #allocation2 [shape = 'f32[128,128]{1,0:T(8,128)}', space=vmem, size = 0x10000, scoped, tag = 'scratch operand']
  %s0 = inlined_call_operand.hbm [shape: f32[256,256], index: 0, kind: input, shape index: {}]
  %s1 = inlined_call_operand.hbm [shape: f32[256,768], index: 1, kind: input, shape index: {}]
  %s2 = inlined_call_operand.hbm [shape: f32[128,128], index: 2, kind: input, shape index: {}]
  %s3 = inlined_call_operand.hbm [shape: f32[128,128], index: 3, kind: input, shape index: {}]
  %s4 = inlined_call_operand.hbm [shape: f32[256,768], index: 4, kind: output, shape index: {}]
  %s5 = sld [smem:[#allocation0]]
  $region81: #{tpu_custom_call.1} parent=0
    _
  %s7 = ssub.s32 1, %s5
  %s8 = scalar_select 0, %s7, %s5
  $region1: #{tpu_custom_call.1} parent=0
    #allocation3 [shape = 'u8[262144]{0}', space=vmem, size = 0x40000, scoped, tag = 'input window, operand 0']
    #allocation4 [shape = 's32[2]{0}', space=sflag, size = 0x8, scoped, tag = 'scoped memory for tpu_custom_call.1']
    #allocation5 [shape = 's32[2]{0}', space=sflag, size = 0x8, scoped, tag = 'scoped memory for tpu_custom_call.1']
    #allocation6 [shape = 'u8[262144]{0}', space=vmem, size = 0x40000, scoped, tag = 'input window, operand 1']
    #allocation7 [shape = 's32[2]{0}', space=sflag, size = 0x8, scoped, tag = 'scoped memory for tpu_custom_call.1']
    #allocation8 [shape = 'u8[65536]{0}', space=vmem, size = 0x10000, scoped, tag = 'input window, operand 2, single buffered']
    #allocation9 [shape = 'u8[65536]{0}', space=vmem, size = 0x10000, scoped, tag = 'input window, operand 3, single buffered']
    #allocation10 [shape = 's32[1]{0}', space=sflag, size = 0x4, scoped, tag = 'scoped memory for tpu_custom_call.1']
    #allocation11 [shape = 'u8[131072]{0}', space=vmem, size = 0x20000, scoped, tag = 'output window, operand 0']
    %9 = vsyncpa [#allocation4], 0
    %s10 = scalar_lea.sflag [#allocation4], 1
    %11 = vsyncpa %s10, 0
    %12 = vsyncpa [#allocation7], 0
    %s13 = scalar_lea.sflag [#allocation7], 1
    %14 = vsyncpa %s13, 0
    %15 = vsyncpa [#allocation10], 0
    %16 = vsyncpa [#allocation5], 0
    %s17 = scalar_lea.sflag [#allocation5], 1
    %18 = vsyncpa %s17, 0
    loop: start=0, step=1, limit=14
    $region2: #{tpu_custom_call.1} parent=1 // loop_pre_header
      _
    $region3: #{tpu_custom_call.1} parent=1 // loop_header
      %s20 = sphi 0, %s24
      %p21 = scmp.ge.s32.totalorder %s20, 14
      %s27 = sphi 0, %s46
      %s28 = sphi 0, %s42
      %s29 = sphi 0, %s38
      %s30 = sphi 0, %s27
      %s31 = sphi 0, %s28
      %s32 = sphi 0, %s29
      %s33 = sphi 0, %s30
      %s34 = sphi 0, %s31
      %s35 = sphi 0, %s32
      %s51 = sphi 0, %s53
      %s54 = sphi 0, %s51
      %s55 = sphi 0, %s54
      %s71 = sphi 0, %s55
      %s79 = sphi 0, %s81
      %s82 = sphi 0, %s79
      %s83 = sphi 0, %s82
      %s99 = sphi 0, %s83
      %s103 = sphi 0, %s103
      %s105 = sphi 0, %s103
      %s106 = sphi 0, %s105
      %s120 = sphi 0, %s106
      %s124 = sphi 0, %s124
      %s126 = sphi 0, %s124
      %s127 = sphi 0, %s126
      %s141 = sphi 0, %s127
      %s149 = sphi 0, %s151
      %s152 = sphi 0, %s149
      %s153 = sphi 0, %s152
      %s169 = sphi 0, %s153
    $region4: #{tpu_custom_call.1} parent=1 // loop_header_branch
      %23 = sbr.rel (%p21) target = $region8
    $region5: #{tpu_custom_call.1} parent=1 // loop_body
      %s25 = ssub.s32 %s20, 1
      %s26 = ssub.s32 %s20, 2
      %s36 = sadd.s32 1, %s29
      %p37 = scmp.ge.s32.totalorder %s36, 1
      %s38 = scalar_select %p37, 0, %s36
      %s39 = sadd.s32 1, %s28
      %s40 = scalar_select %p37, %s39, %s28
      %p41 = scmp.ge.s32.totalorder %s40, 6
      %s42 = scalar_select %p41, 0, %s40
      %s43 = sadd.s32 1, %s27
      %s44 = scalar_select %p41, %s43, %s27
      %p45 = scmp.ge.s32.totalorder %s44, 2
      %s46 = scalar_select %p45, 0, %s44
      %s47 = ssub.s32 %s27, %s46
      %s48 = ssub.s32 %s29, %s38
      %s49 = sor.u32 %s47, %s48
      %p50 = scmp.eq.s32.totalorder %s49, 0
      %s52 = sadd.s32 %s51, 1
      %s53 = scalar_select %p50, %s51, %s52
      %p56 = pneg %p50
      %p57 = scmp.eq.s32.totalorder %s20, 11
      %p58 = por %p56, %p57
      %p59 = scmp.ne.s32.totalorder %s51, %s54
      %p60 = scmp.eq.s32.totalorder %s20, 0
      %p61 = por %p59, %p60
      %p62 = scmp.ne.s32.totalorder %s51, %s54
      %p63 = scmp.eq.s32.totalorder %s25, 11
      %p64 = por %p62, %p63
      %p65 = scmp.ne.s32.totalorder %s54, %s55
      %p66 = scmp.eq.s32.totalorder %s25, 0
      %p67 = por %p65, %p66
      %p68 = scmp.ne.s32.totalorder %s54, %s55
      %p69 = scmp.eq.s32.totalorder %s26, 11
      %p70 = por %p68, %p69
      %p72 = scmp.ne.s32.totalorder %s55, %s71
      %p73 = scmp.eq.s32.totalorder %s26, 0
      %p74 = por %p72, %p73
      %s75 = ssub.s32 %s29, %s38
      %s76 = ssub.s32 %s28, %s42
      %s77 = sor.u32 %s75, %s76
      %p78 = scmp.eq.s32.totalorder %s77, 0
      %s80 = sadd.s32 %s79, 1
      %s81 = scalar_select %p78, %s79, %s80
      %p84 = pneg %p78
      %p85 = scmp.eq.s32.totalorder %s20, 11
      %p86 = por %p84, %p85
      %p87 = scmp.ne.s32.totalorder %s79, %s82
      %p88 = scmp.eq.s32.totalorder %s20, 0
      %p89 = por %p87, %p88
      %p90 = scmp.ne.s32.totalorder %s79, %s82
      %p91 = scmp.eq.s32.totalorder %s25, 11
      %p92 = por %p90, %p91
      %p93 = scmp.ne.s32.totalorder %s82, %s83
      %p94 = scmp.eq.s32.totalorder %s25, 0
      %p95 = por %p93, %p94
      %p96 = scmp.ne.s32.totalorder %s82, %s83
      %p97 = scmp.eq.s32.totalorder %s26, 11
      %p98 = por %p96, %p97
      %p100 = scmp.ne.s32.totalorder %s83, %s99
      %p101 = scmp.eq.s32.totalorder %s26, 0
      %p102 = por %p100, %p101
      %s104 = sadd.s32 %s103, 1
      %p107 = scmp.eq.s32.totalorder %s20, 11
      %p108 = scmp.ne.s32.totalorder %s103, %s105
      %p109 = scmp.eq.s32.totalorder %s20, 0
      %p110 = por %p108, %p109
      %p111 = scmp.ne.s32.totalorder %s103, %s105
      %p112 = scmp.eq.s32.totalorder %s25, 11
      %p113 = por %p111, %p112
      %p114 = scmp.ne.s32.totalorder %s105, %s106
      %p115 = scmp.eq.s32.totalorder %s25, 0
      %p116 = por %p114, %p115
      %p117 = scmp.ne.s32.totalorder %s105, %s106
      %p118 = scmp.eq.s32.totalorder %s26, 11
      %p119 = por %p117, %p118
      %p121 = scmp.ne.s32.totalorder %s106, %s120
      %p122 = scmp.eq.s32.totalorder %s26, 0
      %p123 = por %p121, %p122
      %s125 = sadd.s32 %s124, 1
      %p128 = scmp.eq.s32.totalorder %s20, 11
      %p129 = scmp.ne.s32.totalorder %s124, %s126
      %p130 = scmp.eq.s32.totalorder %s20, 0
      %p131 = por %p129, %p130
      %p132 = scmp.ne.s32.totalorder %s124, %s126
      %p133 = scmp.eq.s32.totalorder %s25, 11
      %p134 = por %p132, %p133
      %p135 = scmp.ne.s32.totalorder %s126, %s127
      %p136 = scmp.eq.s32.totalorder %s25, 0
      %p137 = por %p135, %p136
      %p138 = scmp.ne.s32.totalorder %s126, %s127
      %p139 = scmp.eq.s32.totalorder %s26, 11
      %p140 = por %p138, %p139
      %p142 = scmp.ne.s32.totalorder %s127, %s141
      %p143 = scmp.eq.s32.totalorder %s26, 0
      %p144 = por %p142, %p143
      %s145 = ssub.s32 %s27, %s46
      %s146 = ssub.s32 %s28, %s42
      %s147 = sor.u32 %s145, %s146
      %p148 = scmp.eq.s32.totalorder %s147, 0
      %s150 = sadd.s32 %s149, 1
      %s151 = scalar_select %p148, %s149, %s150
      %p154 = pneg %p148
      %p155 = scmp.eq.s32.totalorder %s20, 11
      %p156 = por %p154, %p155
      %p157 = scmp.ne.s32.totalorder %s149, %s152
      %p158 = scmp.eq.s32.totalorder %s20, 0
      %p159 = por %p157, %p158
      %p160 = scmp.ne.s32.totalorder %s149, %s152
      %p161 = scmp.eq.s32.totalorder %s25, 11
      %p162 = por %p160, %p161
      %p163 = scmp.ne.s32.totalorder %s152, %s153
      %p164 = scmp.eq.s32.totalorder %s25, 0
      %p165 = por %p163, %p164
      %p166 = scmp.ne.s32.totalorder %s152, %s153
      %p167 = scmp.eq.s32.totalorder %s26, 11
      %p168 = por %p166, %p167
      %p170 = scmp.ne.s32.totalorder %s153, %s169
      %p171 = scmp.eq.s32.totalorder %s26, 0
      %p172 = por %p170, %p171
      %p173 = scmp.le.s32.totalorder 1, %s20
      %p174 = scmp.lt.s32.totalorder %s20, 13
      %p175 = pnand %p173, %p174
      %p176 = pneg %p175
      // Predicated region
      $region9: #{tpu_custom_call.1} parent=5 // pred_check
        _
      $region10: #{tpu_custom_call.1} parent=5 // pred_check_branch
        %178 = sbr.rel (%p175) target = $region12
      $region11: #{tpu_custom_call.1} parent=5 // pred_region
        %s179 = ssub.s32 %s20, 1
        // Predicated region
        $region13: #{tpu_custom_call.1} parent=11 // pred_check
          %p180 = pneg %p116
        $region14: #{tpu_custom_call.1} parent=11 // pred_check_branch
          %182 = sbr.rel (%p180) target = $region16
        $region15: #{tpu_custom_call.1} parent=11 // pred_region
          %s184 = ssub.s32 2048, 2048
          %185 = vsyncadd [#allocation7], %s184
          %s186 = sshll.u32 [#allocation8], 4
          %s187 = int_to_ptr.vmem [resolvable:$true] %s186
          %192 = dma.hbm_to_vmem [thread:$0]  %s2, 2048, %s187, [#allocation7], 128, 128, 8
        $region16: #{tpu_custom_call.1} parent=11 // pred_fallthru
          _
        // Predicated region
        $region17: #{tpu_custom_call.1} parent=11 // pred_check
          %p193 = pneg %p137
        $region18: #{tpu_custom_call.1} parent=11 // pred_check_branch
          %195 = sbr.rel (%p193) target = $region20
        $region19: #{tpu_custom_call.1} parent=11 // pred_region
          %s197 = ssub.s32 2048, 2048
          %198 = vsyncadd [#allocation10], %s197
          %s199 = sshll.u32 [#allocation9], 4
          %s200 = int_to_ptr.vmem [resolvable:$true] %s199
          %205 = dma.hbm_to_vmem [thread:$0]  %s3, 2048, %s200, [#allocation10], 128, 128, 8
        $region20: #{tpu_custom_call.1} parent=11 // pred_fallthru
          _
      $region12: #{tpu_custom_call.1} parent=5 // pred_fallthru
        _
      %p206 = scmp.lt.s32.totalorder %s20, 12
      // Predicated region
      $region21: #{tpu_custom_call.1} parent=5 // pred_check
        %p207 = pneg %p206
      $region22: #{tpu_custom_call.1} parent=5 // pred_check_branch
        %209 = sbr.rel (%p207) target = $region24
      $region23: #{tpu_custom_call.1} parent=5 // pred_region
        // Predicated region
        $region25: #{tpu_custom_call.1} parent=23 // pred_check
          %p210 = pneg %p61
        $region26: #{tpu_custom_call.1} parent=23 // pred_check_branch
          %212 = sbr.rel (%p210) target = $region28
        $region27: #{tpu_custom_call.1} parent=23 // pred_region
          %s213 = sand.u32 %s51, 1
          %s214 = scalar_lea.sflag [#allocation4], %s213
          %s215 = sand.u32 %s51, 1
          %s216 = smul.addr %s215, 256
          %s217 = scalar_lea.vmem [#allocation3], %s216
          %s218 = smul.u32 16, %s27
          %s219 = smul.u32 2, %s29
          %s221 = ssub.s32 4096, 4096
          %222 = vsyncadd %s214, %s221
          %s223 = smul.addr %s218, 2
          %s224 = sadd.s32 %s219, %s223
          %s225 = smul.addr %s224, 128
          %s226 = scalar_lea.hbm %s0, %s225
          %s227 = sshll.u32 %s217, 4
          %s228 = int_to_ptr.vmem [resolvable:$true] %s227
          %233 = dma.hbm_to_vmem [thread:$0]  %s226, 4096, %s228, %s214, 256, 256, 16
        $region28: #{tpu_custom_call.1} parent=23 // pred_fallthru
          _
        // Predicated region
        $region29: #{tpu_custom_call.1} parent=23 // pred_check
          %p234 = pneg %p89
        $region30: #{tpu_custom_call.1} parent=23 // pred_check_branch
          %236 = sbr.rel (%p234) target = $region32
        $region31: #{tpu_custom_call.1} parent=23 // pred_region
          %s237 = sand.u32 %s20, 1
          %s238 = scalar_lea.sflag [#allocation7], %s237
          %s239 = sand.u32 %s79, 1
          %s240 = smul.addr %s239, 256
          %s241 = scalar_lea.vmem [#allocation6], %s240
          %s242 = smul.u32 32, %s29
          %s244 = ssub.s32 4096, 4096
          %245 = vsyncadd %s238, %s244
          %s246 = smul.addr %s242, 6
          %s247 = sadd.s32 %s28, %s246
          %s248 = smul.addr %s247, 128
          %s249 = scalar_lea.hbm %s1, %s248
          %s250 = sshll.u32 %s241, 4
          %s251 = int_to_ptr.vmem [resolvable:$true] %s250
          %256 = dma.hbm_to_vmem [thread:$0]  %s249, 4096, %s251, %s238, 768, 128, 8
        $region32: #{tpu_custom_call.1} parent=23 // pred_fallthru
          _
      $region24: #{tpu_custom_call.1} parent=5 // pred_fallthru
        _
      %p257 = scmp.le.s32.totalorder 1, %s20
      %p258 = scmp.lt.s32.totalorder %s20, 13
      %p259 = pnand %p257, %p258
      %p260 = pneg %p259
      // Predicated region
      $region33: #{tpu_custom_call.1} parent=5 // pred_check
        _
      $region34: #{tpu_custom_call.1} parent=5 // pred_check_branch
        %262 = sbr.rel (%p259) target = $region36
      $region35: #{tpu_custom_call.1} parent=5 // pred_region
        %s263 = ssub.s32 %s20, 1
        %s264 = sand.u32 %s54, 1
        %s265 = scalar_lea.sflag [#allocation4], %s264
        %s266 = sand.u32 %s54, 1
        %s267 = smul.addr %s266, 256
        %s268 = scalar_lea.vmem [#allocation3], %s267
        // Predicated region
        $region37: #{tpu_custom_call.1} parent=35 // pred_check
          %p269 = pneg %p67
        $region38: #{tpu_custom_call.1} parent=35 // pred_check_branch
          %271 = sbr.rel (%p269) target = $region40
        $region39: #{tpu_custom_call.1} parent=35 // pred_region
          %272 = dma.done %s265, 4096
        $region40: #{tpu_custom_call.1} parent=35 // pred_fallthru
          _
        %s273 = sand.u32 %s25, 1
        %s274 = scalar_lea.sflag [#allocation7], %s273
        %s275 = sand.u32 %s82, 1
        %s276 = smul.addr %s275, 256
        %s277 = scalar_lea.vmem [#allocation6], %s276
        // Predicated region
        $region41: #{tpu_custom_call.1} parent=35 // pred_check
          %p278 = pneg %p95
        $region42: #{tpu_custom_call.1} parent=35 // pred_check_branch
          %280 = sbr.rel (%p278) target = $region44
        $region43: #{tpu_custom_call.1} parent=35 // pred_region
          %281 = dma.done %s274, 4096
        $region44: #{tpu_custom_call.1} parent=35 // pred_fallthru
          _
        // Predicated region
        $region45: #{tpu_custom_call.1} parent=35 // pred_check
          %p282 = pneg %p116
        $region46: #{tpu_custom_call.1} parent=35 // pred_check_branch
          %284 = sbr.rel (%p282) target = $region48
        $region47: #{tpu_custom_call.1} parent=35 // pred_region
          %285 = dma.done [#allocation7], 2048
        $region48: #{tpu_custom_call.1} parent=35 // pred_fallthru
          _
        // Predicated region
        $region49: #{tpu_custom_call.1} parent=35 // pred_check
          %p286 = pneg %p137
        $region50: #{tpu_custom_call.1} parent=35 // pred_check_branch
          %288 = sbr.rel (%p286) target = $region52
        $region51: #{tpu_custom_call.1} parent=35 // pred_region
          %289 = dma.done [#allocation10], 2048
        $region52: #{tpu_custom_call.1} parent=35 // pred_fallthru
          _
        %s290 = sand.u32 %s54, 1
        %s291 = scalar_lea.sflag [#allocation4], %s290
        %s292 = sand.u32 %s54, 1
        %s293 = smul.addr %s292, 256
        %s294 = scalar_lea.vmem [#allocation3], %s293
        %p295 = pneg %p67
        %p296 = pneg %p64
        %s297 = sand.u32 %s25, 1
        %s298 = scalar_lea.sflag [#allocation7], %s297
        %s299 = sand.u32 %s82, 1
        %s300 = smul.addr %s299, 256
        %s301 = scalar_lea.vmem [#allocation6], %s300
        %p302 = pneg %p95
        %p303 = pneg %p92
        %p304 = pneg %p116
        %p305 = pneg %p113
        %p306 = pneg %p137
        %p307 = pneg %p134
        %p308 = pneg %p165
        %p309 = pneg %p162
        %s310 = sand.u32 %s152, 1
        %s311 = scalar_lea.sflag [#allocation5], %s310
        %s312 = sand.u32 %s152, 1
        %s313 = smul.addr %s312, 128
        %s314 = scalar_lea.vmem [#allocation11], %s313
        %s315 = smul.u32 16, %s30
        %s316 = smul.u32 2, %s32
        %s317 = smul.u32 32, %s32
        %s318 = smul.u32 16, %s30
        %p319 = scmp.eq.s32.totalorder %s32, 0
        // Predicated region
        $region53: #{tpu_custom_call.1} parent=35 // pred_check
          %p320 = pneg %p319
        $region54: #{tpu_custom_call.1} parent=35 // pred_check_branch
          %322 = sbr.rel (%p320) target = $region56
        $region55: #{tpu_custom_call.1} parent=35 // pred_region
          %323 = vst [vmem:[#allocation2] sm:$0xff] 0.0
          %324 = vst [vmem:[#allocation2 + $0x8] sm:$0xff] 0.0
          %325 = vst [vmem:[#allocation2 + $0x10] sm:$0xff] 0.0
          %326 = vst [vmem:[#allocation2 + $0x18] sm:$0xff] 0.0
          %327 = vst [vmem:[#allocation2 + $0x20] sm:$0xff] 0.0
          %328 = vst [vmem:[#allocation2 + $0x28] sm:$0xff] 0.0
          %329 = vst [vmem:[#allocation2 + $0x30] sm:$0xff] 0.0
          %330 = vst [vmem:[#allocation2 + $0x38] sm:$0xff] 0.0
          %331 = vst [vmem:[#allocation2 + $0x40] sm:$0xff] 0.0
          %332 = vst [vmem:[#allocation2 + $0x48] sm:$0xff] 0.0
          %333 = vst [vmem:[#allocation2 + $0x50] sm:$0xff] 0.0
          %334 = vst [vmem:[#allocation2 + $0x58] sm:$0xff] 0.0
          %335 = vst [vmem:[#allocation2 + $0x60] sm:$0xff] 0.0
          %336 = vst [vmem:[#allocation2 + $0x68] sm:$0xff] 0.0
          %337 = vst [vmem:[#allocation2 + $0x70] sm:$0xff] 0.0
          %338 = vst [vmem:[#allocation2 + $0x78] sm:$0xff] 0.0
        $region56: #{tpu_custom_call.1} parent=35 // pred_fallthru
          _
        %v339 = vld [vmem:[#allocation2] sm:$0xff]
        %v340 = vld [vmem:[#allocation2 + $0x8] sm:$0xff]
        %v341 = vld [vmem:[#allocation2 + $0x10] sm:$0xff]
        %v342 = vld [vmem:[#allocation2 + $0x18] sm:$0xff]
        %v343 = vld [vmem:[#allocation2 + $0x20] sm:$0xff]
        %v344 = vld [vmem:[#allocation2 + $0x28] sm:$0xff]
        %v345 = vld [vmem:[#allocation2 + $0x30] sm:$0xff]
        %v346 = vld [vmem:[#allocation2 + $0x38] sm:$0xff]
        %v347 = vld [vmem:[#allocation2 + $0x40] sm:$0xff]
        %v348 = vld [vmem:[#allocation2 + $0x48] sm:$0xff]
        %v349 = vld [vmem:[#allocation2 + $0x50] sm:$0xff]
        %v350 = vld [vmem:[#allocation2 + $0x58] sm:$0xff]
        %v351 = vld [vmem:[#allocation2 + $0x60] sm:$0xff]
        %v352 = vld [vmem:[#allocation2 + $0x68] sm:$0xff]
        %v353 = vld [vmem:[#allocation2 + $0x70] sm:$0xff]
        %v354 = vld [vmem:[#allocation2 + $0x78] sm:$0xff]
        %v355 = vld [vmem:[%s268] sm:$0xff]
        %v356 = vld [vmem:[%s268 + $0x8] sm:$0xff]
        %v357 = vld [vmem:[%s268 + $0x10] sm:$0xff]
        %v358 = vld [vmem:[%s268 + $0x18] sm:$0xff]
        %v359 = vld [vmem:[%s268 + $0x20] sm:$0xff]
        %v360 = vld [vmem:[%s268 + $0x28] sm:$0xff]
        %v361 = vld [vmem:[%s268 + $0x30] sm:$0xff]
        %v362 = vld [vmem:[%s268 + $0x38] sm:$0xff]
        %v363 = vld [vmem:[%s268 + $0x40] sm:$0xff]
        %v364 = vld [vmem:[%s268 + $0x48] sm:$0xff]
        %v365 = vld [vmem:[%s268 + $0x50] sm:$0xff]
        %v366 = vld [vmem:[%s268 + $0x58] sm:$0xff]
        %v367 = vld [vmem:[%s268 + $0x60] sm:$0xff]
        %v368 = vld [vmem:[%s268 + $0x68] sm:$0xff]
        %v369 = vld [vmem:[%s268 + $0x70] sm:$0xff]
        %v370 = vld [vmem:[%s268 + $0x78] sm:$0xff]
        %v371 = vld [vmem:[%s268 + $0x80] sm:$0xff]
        %v372 = vld [vmem:[%s268 + $0x88] sm:$0xff]
        %v373 = vld [vmem:[%s268 + $0x90] sm:$0xff]
        %v374 = vld [vmem:[%s268 + $0x98] sm:$0xff]
        %v375 = vld [vmem:[%s268 + $0xa0] sm:$0xff]
        %v376 = vld [vmem:[%s268 + $0xa8] sm:$0xff]
        %v377 = vld [vmem:[%s268 + $0xb0] sm:$0xff]
        %v378 = vld [vmem:[%s268 + $0xb8] sm:$0xff]
        %v379 = vld [vmem:[%s268 + $0xc0] sm:$0xff]
        %v380 = vld [vmem:[%s268 + $0xc8] sm:$0xff]
        %v381 = vld [vmem:[%s268 + $0xd0] sm:$0xff]
        %v382 = vld [vmem:[%s268 + $0xd8] sm:$0xff]
        %v383 = vld [vmem:[%s268 + $0xe0] sm:$0xff]
        %v384 = vld [vmem:[%s268 + $0xe8] sm:$0xff]
        %v385 = vld [vmem:[%s268 + $0xf0] sm:$0xff]
        %v386 = vld [vmem:[%s268 + $0xf8] sm:$0xff]
        %v387 = vld [vmem:[%s277] sm:$0xff]
        %v388 = vld [vmem:[%s277 + $0x8] sm:$0xff]
        %v389 = vld [vmem:[%s277 + $0x10] sm:$0xff]
        %v390 = vld [vmem:[%s277 + $0x18] sm:$0xff]
        %v391 = vld [vmem:[%s277 + $0x20] sm:$0xff]
        %v392 = vld [vmem:[%s277 + $0x28] sm:$0xff]
        %v393 = vld [vmem:[%s277 + $0x30] sm:$0xff]
        %v394 = vld [vmem:[%s277 + $0x38] sm:$0xff]
        %v395 = vld [vmem:[%s277 + $0x40] sm:$0xff]
        %v396 = vld [vmem:[%s277 + $0x48] sm:$0xff]
        %v397 = vld [vmem:[%s277 + $0x50] sm:$0xff]
        %v398 = vld [vmem:[%s277 + $0x58] sm:$0xff]
        %v399 = vld [vmem:[%s277 + $0x60] sm:$0xff]
        %v400 = vld [vmem:[%s277 + $0x68] sm:$0xff]
        %v401 = vld [vmem:[%s277 + $0x70] sm:$0xff]
        %v402 = vld [vmem:[%s277 + $0x78] sm:$0xff]
        %v403 = vld [vmem:[%s277 + $0x80] sm:$0xff]
        %v404 = vld [vmem:[%s277 + $0x88] sm:$0xff]
        %v405 = vld [vmem:[%s277 + $0x90] sm:$0xff]
        %v406 = vld [vmem:[%s277 + $0x98] sm:$0xff]
        %v407 = vld [vmem:[%s277 + $0xa0] sm:$0xff]
        %v408 = vld [vmem:[%s277 + $0xa8] sm:$0xff]
        %v409 = vld [vmem:[%s277 + $0xb0] sm:$0xff]
        %v410 = vld [vmem:[%s277 + $0xb8] sm:$0xff]
        %v411 = vld [vmem:[%s277 + $0xc0] sm:$0xff]
        %v412 = vld [vmem:[%s277 + $0xc8] sm:$0xff]
        %v413 = vld [vmem:[%s277 + $0xd0] sm:$0xff]
        %v414 = vld [vmem:[%s277 + $0xd8] sm:$0xff]
        %v415 = vld [vmem:[%s277 + $0xe0] sm:$0xff]
        %v416 = vld [vmem:[%s277 + $0xe8] sm:$0xff]
        %v417 = vld [vmem:[%s277 + $0xf0] sm:$0xff]
        %v418 = vld [vmem:[%s277 + $0xf8] sm:$0xff]
        %419 = vmatprep.subr.mxu0 0.0
        %420 = vmatpush1.msra.mxu0 %v402
        %421 = vmatprep.subr.mxu0 0.0
        %422 = vmatpush1.msra.mxu0 %v401
        %423 = vmatprep.subr.mxu0 0.0
        %424 = vmatpush1.msra.mxu0 %v400
        %425 = vmatprep.subr.mxu0 0.0
        %426 = vmatpush1.msra.mxu0 %v399
        %427 = vmatprep.subr.mxu0 0.0
        %428 = vmatpush1.msra.mxu0 %v398
        %429 = vmatprep.subr.mxu0 0.0
        %430 = vmatpush1.msra.mxu0 %v397
        %431 = vmatprep.subr.mxu0 0.0
        %432 = vmatpush1.msra.mxu0 %v396
        %433 = vmatprep.subr.mxu0 0.0
        %434 = vmatpush1.msra.mxu0 %v395
        %435 = vmatprep.subr.mxu0 0.0
        %436 = vmatpush1.msra.mxu0 %v394
        %437 = vmatprep.subr.mxu0 0.0
        %438 = vmatpush1.msra.mxu0 %v393
        %439 = vmatprep.subr.mxu0 0.0
        %440 = vmatpush1.msra.mxu0 %v392
        %441 = vmatprep.subr.mxu0 0.0
        %442 = vmatpush1.msra.mxu0 %v391
        %443 = vmatprep.subr.mxu0 0.0
        %444 = vmatpush1.msra.mxu0 %v390
        %445 = vmatprep.subr.mxu0 0.0
        %446 = vmatpush1.msra.mxu0 %v389
        %447 = vmatprep.subr.mxu0 0.0
        %448 = vmatpush1.msra.mxu0 %v388
        %449 = vmatprep.subr.mxu0 0.0
        %450 = vmatpush1.msra.mxu0 %v387
        %451 = vmatprep.subr.mxu0 0.0
        %452 = vmatpush2.msra.mxu0 %v418
        %453 = vmatprep.subr.mxu0 0.0
        %454 = vmatpush2.msra.mxu0 %v417
        %455 = vmatprep.subr.mxu0 0.0
        %456 = vmatpush2.msra.mxu0 %v416
        %457 = vmatprep.subr.mxu0 0.0
        %458 = vmatpush2.msra.mxu0 %v415
        %459 = vmatprep.subr.mxu0 0.0
        %460 = vmatpush2.msra.mxu0 %v414
        %461 = vmatprep.subr.mxu0 0.0
        %462 = vmatpush2.msra.mxu0 %v413
        %463 = vmatprep.subr.mxu0 0.0
        %464 = vmatpush2.msra.mxu0 %v412
        %465 = vmatprep.subr.mxu0 0.0
        %466 = vmatpush2.msra.mxu0 %v411
        %467 = vmatprep.subr.mxu0 0.0
        %468 = vmatpush2.msra.mxu0 %v410
        %469 = vmatprep.subr.mxu0 0.0
        %470 = vmatpush2.msra.mxu0 %v409
        %471 = vmatprep.subr.mxu0 0.0
        %472 = vmatpush2.msra.mxu0 %v408
        %473 = vmatprep.subr.mxu0 0.0
        %474 = vmatpush2.msra.mxu0 %v407
        %475 = vmatprep.subr.mxu0 0.0
        %476 = vmatpush2.msra.mxu0 %v406
        %477 = vmatprep.subr.mxu0 0.0
        %478 = vmatpush2.msra.mxu0 %v405
        %479 = vmatprep.subr.mxu0 0.0
        %480 = vmatpush2.msra.mxu0 %v404
        %481 = vmatprep.subr.mxu0 0.0
        %482 = vmatpush2.msra.mxu0 %v403
        %483 = vmatprep.mubr.f32.mxu0 %v356
        %484 = vmatmul.mubr.f32.gmra.mxu0 %v355
        %v485 = vpop.f32.mrf.mxu0
        %v486 = vadd.f32 0.0, %v485
        %v487 = vpop.f32.mrf.mxu0
        %488 = vmatprep.mubr.f32.mxu0 %v358
        %489 = vmatmul.mubr.f32.gmra.mxu0 %v357
        %v490 = vpop.f32.mrf.mxu0
        %v491 = vadd.f32 0.0, %v490
        %v492 = vpop.f32.mrf.mxu0
        %493 = vmatprep.mubr.f32.mxu0 %v360
        %494 = vmatmul.mubr.f32.gmra.mxu0 %v359
        %v495 = vpop.f32.mrf.mxu0
        %v496 = vadd.f32 0.0, %v495
        %v497 = vpop.f32.mrf.mxu0
        %498 = vmatprep.mubr.f32.mxu0 %v362
        %499 = vmatmul.mubr.f32.gmra.mxu0 %v361
        %v500 = vpop.f32.mrf.mxu0
        %v501 = vadd.f32 0.0, %v500
        %v502 = vpop.f32.mrf.mxu0
        %503 = vmatprep.mubr.f32.mxu0 %v364
        %504 = vmatmul.mubr.f32.gmra.mxu0 %v363
        %v505 = vpop.f32.mrf.mxu0
        %v506 = vadd.f32 0.0, %v505
        %v507 = vpop.f32.mrf.mxu0
        %508 = vmatprep.mubr.f32.mxu0 %v366
        %509 = vmatmul.mubr.f32.gmra.mxu0 %v365
        %v510 = vpop.f32.mrf.mxu0
        %v511 = vadd.f32 0.0, %v510
        %v512 = vpop.f32.mrf.mxu0
        %513 = vmatprep.mubr.f32.mxu0 %v368
        %514 = vmatmul.mubr.f32.gmra.mxu0 %v367
        %v515 = vpop.f32.mrf.mxu0
        %v516 = vadd.f32 0.0, %v515
        %v517 = vpop.f32.mrf.mxu0
        %518 = vmatprep.mubr.f32.mxu0 %v370
        %519 = vmatmul.mubr.f32.gmra.mxu0 %v369
        %v520 = vpop.f32.mrf.mxu0
        %v521 = vadd.f32 0.0, %v520
        %v522 = vpop.f32.mrf.mxu0
        %523 = vmatprep.mubr.f32.mxu0 %v372
        %524 = vmatmul.mubr.f32.gmra.mxu0 %v371
        %v525 = vpop.f32.mrf.mxu0
        %v526 = vadd.f32 0.0, %v525
        %v527 = vpop.f32.mrf.mxu0
        %528 = vmatprep.mubr.f32.mxu0 %v374
        %529 = vmatmul.mubr.f32.gmra.mxu0 %v373
        %v530 = vpop.f32.mrf.mxu0
        %v531 = vadd.f32 0.0, %v530
        %v532 = vpop.f32.mrf.mxu0
        %533 = vmatprep.mubr.f32.mxu0 %v376
        %534 = vmatmul.mubr.f32.gmra.mxu0 %v375
        %v535 = vpop.f32.mrf.mxu0
        %v536 = vadd.f32 0.0, %v535
        %v537 = vpop.f32.mrf.mxu0
        %538 = vmatprep.mubr.f32.mxu0 %v378
        %539 = vmatmul.mubr.f32.gmra.mxu0 %v377
        %v540 = vpop.f32.mrf.mxu0
        %v541 = vadd.f32 0.0, %v540
        %v542 = vpop.f32.mrf.mxu0
        %543 = vmatprep.mubr.f32.mxu0 %v380
        %544 = vmatmul.mubr.f32.gmra.mxu0 %v379
        %v545 = vpop.f32.mrf.mxu0
        %v546 = vadd.f32 0.0, %v545
        %v547 = vpop.f32.mrf.mxu0
        %548 = vmatprep.mubr.f32.mxu0 %v382
        %549 = vmatmul.mubr.f32.gmra.mxu0 %v381
        %v550 = vpop.f32.mrf.mxu0
        %v551 = vadd.f32 0.0, %v550
        %v552 = vpop.f32.mrf.mxu0
        %553 = vmatprep.mubr.f32.mxu0 %v384
        %554 = vmatmul.mubr.f32.gmra.mxu0 %v383
        %v555 = vpop.f32.mrf.mxu0
        %v556 = vadd.f32 0.0, %v555
        %v557 = vpop.f32.mrf.mxu0
        %558 = vmatprep.mubr.f32.mxu0 %v386
        %559 = vmatmul.mubr.f32.gmra.mxu0 %v385
        %v560 = vpop.f32.mrf.mxu0
        %v561 = vadd.f32 0.0, %v560
        %v562 = vpop.f32.mrf.mxu0
        %563 = vdwg.mxu0
        %v564 = vadd.f32 %v339, %v486
        %v565 = vadd.f32 %v340, %v491
        %v566 = vadd.f32 %v341, %v496
        %v567 = vadd.f32 %v342, %v501
        %v568 = vadd.f32 %v343, %v506
        %v569 = vadd.f32 %v344, %v511
        %v570 = vadd.f32 %v345, %v516
        %v571 = vadd.f32 %v346, %v521
        %v572 = vadd.f32 %v347, %v526
        %v573 = vadd.f32 %v348, %v531
        %v574 = vadd.f32 %v349, %v536
        %v575 = vadd.f32 %v350, %v541
        %v576 = vadd.f32 %v351, %v546
        %v577 = vadd.f32 %v352, %v551
        %v578 = vadd.f32 %v353, %v556
        %v579 = vadd.f32 %v354, %v561
        %580 = vst [vmem:[#allocation2] sm:$0xff] %v564
        %581 = vst [vmem:[#allocation2 + $0x8] sm:$0xff] %v565
        %582 = vst [vmem:[#allocation2 + $0x10] sm:$0xff] %v566
        %583 = vst [vmem:[#allocation2 + $0x18] sm:$0xff] %v567
        %584 = vst [vmem:[#allocation2 + $0x20] sm:$0xff] %v568
        %585 = vst [vmem:[#allocation2 + $0x28] sm:$0xff] %v569
        %586 = vst [vmem:[#allocation2 + $0x30] sm:$0xff] %v570
        %587 = vst [vmem:[#allocation2 + $0x38] sm:$0xff] %v571
        %588 = vst [vmem:[#allocation2 + $0x40] sm:$0xff] %v572
        %589 = vst [vmem:[#allocation2 + $0x48] sm:$0xff] %v573
        %590 = vst [vmem:[#allocation2 + $0x50] sm:$0xff] %v574
        %591 = vst [vmem:[#allocation2 + $0x58] sm:$0xff] %v575
        %592 = vst [vmem:[#allocation2 + $0x60] sm:$0xff] %v576
        %593 = vst [vmem:[#allocation2 + $0x68] sm:$0xff] %v577
        %594 = vst [vmem:[#allocation2 + $0x70] sm:$0xff] %v578
        %595 = vst [vmem:[#allocation2 + $0x78] sm:$0xff] %v579
        // Predicated region
        $region57: #{tpu_custom_call.1} parent=35 // pred_check
          %p596 = pneg %p319
        $region58: #{tpu_custom_call.1} parent=35 // pred_check_branch
          %598 = sbr.rel (%p596) target = $region60
        $region59: #{tpu_custom_call.1} parent=35 // pred_region
          %v599 = vld [vmem:[#allocation2] sm:$0xff]
          %v600 = vld [vmem:[#allocation2 + $0x8] sm:$0xff]
          %v601 = vld [vmem:[#allocation2 + $0x10] sm:$0xff]
          %v602 = vld [vmem:[#allocation2 + $0x18] sm:$0xff]
          %v603 = vld [vmem:[#allocation2 + $0x20] sm:$0xff]
          %v604 = vld [vmem:[#allocation2 + $0x28] sm:$0xff]
          %v605 = vld [vmem:[#allocation2 + $0x30] sm:$0xff]
          %v606 = vld [vmem:[#allocation2 + $0x38] sm:$0xff]
          %v607 = vld [vmem:[#allocation2 + $0x40] sm:$0xff]
          %v608 = vld [vmem:[#allocation2 + $0x48] sm:$0xff]
          %v609 = vld [vmem:[#allocation2 + $0x50] sm:$0xff]
          %v610 = vld [vmem:[#allocation2 + $0x58] sm:$0xff]
          %v611 = vld [vmem:[#allocation2 + $0x60] sm:$0xff]
          %v612 = vld [vmem:[#allocation2 + $0x68] sm:$0xff]
          %v613 = vld [vmem:[#allocation2 + $0x70] sm:$0xff]
          %v614 = vld [vmem:[#allocation2 + $0x78] sm:$0xff]
          %p615 = scmp.lt.s32.totalorder %s31, 4
          // Predicated region
          $region61: #{tpu_custom_call.1} parent=59 // pred_check
            %p616 = pneg %p615
          $region62: #{tpu_custom_call.1} parent=59 // pred_check_branch
            %618 = sbr.rel (%p616) target = $region64
          $region63: #{tpu_custom_call.1} parent=59 // pred_region
            %v619 = vld [vmem:[#allocation8] sm:$0xff]
            %v620 = vld [vmem:[#allocation8 + $0x8] sm:$0xff]
            %v621 = vld [vmem:[#allocation8 + $0x10] sm:$0xff]
            %v622 = vld [vmem:[#allocation8 + $0x18] sm:$0xff]
            %v623 = vld [vmem:[#allocation8 + $0x20] sm:$0xff]
            %v624 = vld [vmem:[#allocation8 + $0x28] sm:$0xff]
            %v625 = vld [vmem:[#allocation8 + $0x30] sm:$0xff]
            %v626 = vld [vmem:[#allocation8 + $0x38] sm:$0xff]
            %v627 = vld [vmem:[#allocation8 + $0x40] sm:$0xff]
            %v628 = vld [vmem:[#allocation8 + $0x48] sm:$0xff]
            %v629 = vld [vmem:[#allocation8 + $0x50] sm:$0xff]
            %v630 = vld [vmem:[#allocation8 + $0x58] sm:$0xff]
            %v631 = vld [vmem:[#allocation8 + $0x60] sm:$0xff]
            %v632 = vld [vmem:[#allocation8 + $0x68] sm:$0xff]
            %v633 = vld [vmem:[#allocation8 + $0x70] sm:$0xff]
            %v634 = vld [vmem:[#allocation8 + $0x78] sm:$0xff]
            %v635 = vld [vmem:[#allocation9] sm:$0xff]
            %v636 = vld [vmem:[#allocation9 + $0x8] sm:$0xff]
            %v637 = vld [vmem:[#allocation9 + $0x10] sm:$0xff]
            %v638 = vld [vmem:[#allocation9 + $0x18] sm:$0xff]
            %v639 = vld [vmem:[#allocation9 + $0x20] sm:$0xff]
            %v640 = vld [vmem:[#allocation9 + $0x28] sm:$0xff]
            %v641 = vld [vmem:[#allocation9 + $0x30] sm:$0xff]
            %v642 = vld [vmem:[#allocation9 + $0x38] sm:$0xff]
            %v643 = vld [vmem:[#allocation9 + $0x40] sm:$0xff]
            %v644 = vld [vmem:[#allocation9 + $0x48] sm:$0xff]
            %v645 = vld [vmem:[#allocation9 + $0x50] sm:$0xff]
            %v646 = vld [vmem:[#allocation9 + $0x58] sm:$0xff]
            %v647 = vld [vmem:[#allocation9 + $0x60] sm:$0xff]
            %v648 = vld [vmem:[#allocation9 + $0x68] sm:$0xff]
            %v649 = vld [vmem:[#allocation9 + $0x70] sm:$0xff]
            %v650 = vld [vmem:[#allocation9 + $0x78] sm:$0xff]
            %v651 = vsub.f32 0.0, %v599
            %v652 = vsub.f32 0.0, %v600
            %v653 = vsub.f32 0.0, %v601
            %v654 = vsub.f32 0.0, %v602
            %v655 = vsub.f32 0.0, %v603
            %v656 = vsub.f32 0.0, %v604
            %v657 = vsub.f32 0.0, %v605
            %v658 = vsub.f32 0.0, %v606
            %v659 = vsub.f32 0.0, %v607
            %v660 = vsub.f32 0.0, %v608
            %v661 = vsub.f32 0.0, %v609
            %v662 = vsub.f32 0.0, %v610
            %v663 = vsub.f32 0.0, %v611
            %v664 = vsub.f32 0.0, %v612
            %v665 = vsub.f32 0.0, %v613
            %v666 = vsub.f32 0.0, %v614
            %683 = vrot.lane.b32.xlu0 %v651, 64
            %v684 = vpop.permute.xlu0 %683
            %685 = vrot.lane.b32.xlu0 %v652, 64
            %v686 = vpop.permute.xlu0 %685
            %687 = vrot.lane.b32.xlu0 %v653, 64
            %v688 = vpop.permute.xlu0 %687
            %689 = vrot.lane.b32.xlu0 %v654, 64
            %v690 = vpop.permute.xlu0 %689
            %691 = vrot.lane.b32.xlu0 %v655, 64
            %v692 = vpop.permute.xlu0 %691
            %693 = vrot.lane.b32.xlu0 %v656, 64
            %v694 = vpop.permute.xlu0 %693
            %695 = vrot.lane.b32.xlu0 %v657, 64
            %v696 = vpop.permute.xlu0 %695
            %697 = vrot.lane.b32.xlu0 %v658, 64
            %v698 = vpop.permute.xlu0 %697
            %699 = vrot.lane.b32.xlu0 %v659, 64
            %v700 = vpop.permute.xlu0 %699
            %701 = vrot.lane.b32.xlu0 %v660, 64
            %v702 = vpop.permute.xlu0 %701
            %703 = vrot.lane.b32.xlu0 %v661, 64
            %v704 = vpop.permute.xlu0 %703
            %705 = vrot.lane.b32.xlu0 %v662, 64
            %v706 = vpop.permute.xlu0 %705
            %707 = vrot.lane.b32.xlu0 %v663, 64
            %v708 = vpop.permute.xlu0 %707
            %709 = vrot.lane.b32.xlu0 %v664, 64
            %v710 = vpop.permute.xlu0 %709
            %711 = vrot.lane.b32.xlu0 %v665, 64
            %v712 = vpop.permute.xlu0 %711
            %713 = vrot.lane.b32.xlu0 %v666, 64
            %v714 = vpop.permute.xlu0 %713
            %747 = vrot.lane.b32.xlu0 %v599, 64
            %v748 = vpop.permute.xlu0 %747
            %749 = vrot.lane.b32.xlu0 %v600, 64
            %v750 = vpop.permute.xlu0 %749
            %751 = vrot.lane.b32.xlu0 %v601, 64
            %v752 = vpop.permute.xlu0 %751
            %753 = vrot.lane.b32.xlu0 %v602, 64
            %v754 = vpop.permute.xlu0 %753
            %755 = vrot.lane.b32.xlu0 %v603, 64
            %v756 = vpop.permute.xlu0 %755
            %757 = vrot.lane.b32.xlu0 %v604, 64
            %v758 = vpop.permute.xlu0 %757
            %759 = vrot.lane.b32.xlu0 %v605, 64
            %v760 = vpop.permute.xlu0 %759
            %761 = vrot.lane.b32.xlu0 %v606, 64
            %v762 = vpop.permute.xlu0 %761
            %763 = vrot.lane.b32.xlu0 %v607, 64
            %v764 = vpop.permute.xlu0 %763
            %765 = vrot.lane.b32.xlu0 %v608, 64
            %v766 = vpop.permute.xlu0 %765
            %767 = vrot.lane.b32.xlu0 %v609, 64
            %v768 = vpop.permute.xlu0 %767
            %769 = vrot.lane.b32.xlu0 %v610, 64
            %v770 = vpop.permute.xlu0 %769
            %771 = vrot.lane.b32.xlu0 %v611, 64
            %v772 = vpop.permute.xlu0 %771
            %773 = vrot.lane.b32.xlu0 %v612, 64
            %v774 = vpop.permute.xlu0 %773
            %775 = vrot.lane.b32.xlu0 %v613, 64
            %v776 = vpop.permute.xlu0 %775
            %777 = vrot.lane.b32.xlu0 %v614, 64
            %v778 = vpop.permute.xlu0 %777
            %vm795 = vcmask 523264
            %v796 = vsel %vm795, %v684, %v748
            %v797 = vsel %vm795, %v686, %v750
            %v798 = vsel %vm795, %v688, %v752
            %v799 = vsel %vm795, %v690, %v754
            %v800 = vsel %vm795, %v692, %v756
            %v801 = vsel %vm795, %v694, %v758
            %v802 = vsel %vm795, %v696, %v760
            %v803 = vsel %vm795, %v698, %v762
            %v804 = vsel %vm795, %v700, %v764
            %v805 = vsel %vm795, %v702, %v766
            %v806 = vsel %vm795, %v704, %v768
            %v807 = vsel %vm795, %v706, %v770
            %v808 = vsel %vm795, %v708, %v772
            %v809 = vsel %vm795, %v710, %v774
            %v810 = vsel %vm795, %v712, %v776
            %v811 = vsel %vm795, %v714, %v778
            %v812 = vmul.f32 %v599, %v619
            %v813 = vmul.f32 %v600, %v620
            %v814 = vmul.f32 %v601, %v621
            %v815 = vmul.f32 %v602, %v622
            %v816 = vmul.f32 %v603, %v623
            %v817 = vmul.f32 %v604, %v624
            %v818 = vmul.f32 %v605, %v625
            %v819 = vmul.f32 %v606, %v626
            %v820 = vmul.f32 %v607, %v627
            %v821 = vmul.f32 %v608, %v628
            %v822 = vmul.f32 %v609, %v629
            %v823 = vmul.f32 %v610, %v630
            %v824 = vmul.f32 %v611, %v631
            %v825 = vmul.f32 %v612, %v632
            %v826 = vmul.f32 %v613, %v633
            %v827 = vmul.f32 %v614, %v634
            %v828 = vmul.f32 %v796, %v635
            %v829 = vmul.f32 %v797, %v636
            %v830 = vmul.f32 %v798, %v637
            %v831 = vmul.f32 %v799, %v638
            %v832 = vmul.f32 %v800, %v639
            %v833 = vmul.f32 %v801, %v640
            %v834 = vmul.f32 %v802, %v641
            %v835 = vmul.f32 %v803, %v642
            %v836 = vmul.f32 %v804, %v643
            %v837 = vmul.f32 %v805, %v644
            %v838 = vmul.f32 %v806, %v645
            %v839 = vmul.f32 %v807, %v646
            %v840 = vmul.f32 %v808, %v647
            %v841 = vmul.f32 %v809, %v648
            %v842 = vmul.f32 %v810, %v649
            %v843 = vmul.f32 %v811, %v650
            %v844 = vadd.f32 %v812, %v828
            %v845 = vadd.f32 %v813, %v829
            %v846 = vadd.f32 %v814, %v830
            %v847 = vadd.f32 %v815, %v831
            %v848 = vadd.f32 %v816, %v832
            %v849 = vadd.f32 %v817, %v833
            %v850 = vadd.f32 %v818, %v834
            %v851 = vadd.f32 %v819, %v835
            %v852 = vadd.f32 %v820, %v836
            %v853 = vadd.f32 %v821, %v837
            %v854 = vadd.f32 %v822, %v838
            %v855 = vadd.f32 %v823, %v839
            %v856 = vadd.f32 %v824, %v840
            %v857 = vadd.f32 %v825, %v841
            %v858 = vadd.f32 %v826, %v842
            %v859 = vadd.f32 %v827, %v843
            %p860 = scmp.lt.s32.totalorder %s31, 2
            %s861 = scalar_select %p860, 0.088388346, 1.0
            %v862 = vstv %s861
            %v863 = vmul.f32 %v844, %v862
            %v864 = vmul.f32 %v845, %v862
            %v865 = vmul.f32 %v846, %v862
            %v866 = vmul.f32 %v847, %v862
            %v867 = vmul.f32 %v848, %v862
            %v868 = vmul.f32 %v849, %v862
            %v869 = vmul.f32 %v850, %v862
            %v870 = vmul.f32 %v851, %v862
            %v871 = vmul.f32 %v852, %v862
            %v872 = vmul.f32 %v853, %v862
            %v873 = vmul.f32 %v854, %v862
            %v874 = vmul.f32 %v855, %v862
            %v875 = vmul.f32 %v856, %v862
            %v876 = vmul.f32 %v857, %v862
            %v877 = vmul.f32 %v858, %v862
            %v878 = vmul.f32 %v859, %v862
            %879 = vst [vmem:[%s314] sm:$0xff] %v863
            %880 = vst [vmem:[%s314 + $0x8] sm:$0xff] %v864
            %881 = vst [vmem:[%s314 + $0x10] sm:$0xff] %v865
            %882 = vst [vmem:[%s314 + $0x18] sm:$0xff] %v866
            %883 = vst [vmem:[%s314 + $0x20] sm:$0xff] %v867
            %884 = vst [vmem:[%s314 + $0x28] sm:$0xff] %v868
            %885 = vst [vmem:[%s314 + $0x30] sm:$0xff] %v869
            %886 = vst [vmem:[%s314 + $0x38] sm:$0xff] %v870
            %887 = vst [vmem:[%s314 + $0x40] sm:$0xff] %v871
            %888 = vst [vmem:[%s314 + $0x48] sm:$0xff] %v872
            %889 = vst [vmem:[%s314 + $0x50] sm:$0xff] %v873
            %890 = vst [vmem:[%s314 + $0x58] sm:$0xff] %v874
            %891 = vst [vmem:[%s314 + $0x60] sm:$0xff] %v875
            %892 = vst [vmem:[%s314 + $0x68] sm:$0xff] %v876
            %893 = vst [vmem:[%s314 + $0x70] sm:$0xff] %v877
            %894 = vst [vmem:[%s314 + $0x78] sm:$0xff] %v878
          $region64: #{tpu_custom_call.1} parent=59 // pred_fallthru
            _
          %p895 = scmp.ge.s32.totalorder %s31, 4
          // Predicated region
          $region65: #{tpu_custom_call.1} parent=59 // pred_check
            %p896 = pneg %p895
          $region66: #{tpu_custom_call.1} parent=59 // pred_check_branch
            %898 = sbr.rel (%p896) target = $region68
          $region67: #{tpu_custom_call.1} parent=59 // pred_region
            %899 = vst [vmem:[%s314] sm:$0xff] %v599
            %900 = vst [vmem:[%s314 + $0x8] sm:$0xff] %v600
            %901 = vst [vmem:[%s314 + $0x10] sm:$0xff] %v601
            %902 = vst [vmem:[%s314 + $0x18] sm:$0xff] %v602
            %903 = vst [vmem:[%s314 + $0x20] sm:$0xff] %v603
            %904 = vst [vmem:[%s314 + $0x28] sm:$0xff] %v604
            %905 = vst [vmem:[%s314 + $0x30] sm:$0xff] %v605
            %906 = vst [vmem:[%s314 + $0x38] sm:$0xff] %v606
            %907 = vst [vmem:[%s314 + $0x40] sm:$0xff] %v607
            %908 = vst [vmem:[%s314 + $0x48] sm:$0xff] %v608
            %909 = vst [vmem:[%s314 + $0x50] sm:$0xff] %v609
            %910 = vst [vmem:[%s314 + $0x58] sm:$0xff] %v610
            %911 = vst [vmem:[%s314 + $0x60] sm:$0xff] %v611
            %912 = vst [vmem:[%s314 + $0x68] sm:$0xff] %v612
            %913 = vst [vmem:[%s314 + $0x70] sm:$0xff] %v613
            %914 = vst [vmem:[%s314 + $0x78] sm:$0xff] %v614
          $region68: #{tpu_custom_call.1} parent=59 // pred_fallthru
            _
        $region60: #{tpu_custom_call.1} parent=35 // pred_fallthru
          _
        %s915 = sand.u32 %s152, 1
        %s916 = scalar_lea.sflag [#allocation5], %s915
        %s917 = sand.u32 %s152, 1
        %s918 = smul.addr %s917, 128
        %s919 = scalar_lea.vmem [#allocation11], %s918
        // Predicated region
        $region69: #{tpu_custom_call.1} parent=35 // pred_check
          %p920 = pneg %p162
        $region70: #{tpu_custom_call.1} parent=35 // pred_check_branch
          %922 = sbr.rel (%p920) target = $region72
        $region71: #{tpu_custom_call.1} parent=35 // pred_region
          %s923 = smul.u32 16, %s30
          %s925 = ssub.s32 2048, 2048
          %926 = vsyncadd %s916, %s925
          %s927 = smul.addr %s923, 6
          %s928 = sadd.s32 %s31, %s927
          %s929 = smul.addr %s928, 128
          %s930 = scalar_lea.hbm %s4, %s929
          %s931 = sshll.u32 %s919, 4
          %s932 = int_to_ptr.vmem [resolvable:$true] %s931
          %937 = dma.vmem_to_hbm [thread:$0]  %s932, 2048, %s930, %s916, 128, 768, 8
        $region72: #{tpu_custom_call.1} parent=35 // pred_fallthru
          _
      $region36: #{tpu_custom_call.1} parent=5 // pred_fallthru
        _
      %p938 = scmp.le.s32.totalorder 2, %s20
      // Predicated region
      $region73: #{tpu_custom_call.1} parent=5 // pred_check
        %p939 = pneg %p938
      $region74: #{tpu_custom_call.1} parent=5 // pred_check_branch
        %941 = sbr.rel (%p939) target = $region76
      $region75: #{tpu_custom_call.1} parent=5 // pred_region
        %s942 = ssub.s32 %s20, 2
        // Predicated region
        $region77: #{tpu_custom_call.1} parent=75 // pred_check
          %p943 = pneg %p168
        $region78: #{tpu_custom_call.1} parent=75 // pred_check_branch
          %945 = sbr.rel (%p943) target = $region80
        $region79: #{tpu_custom_call.1} parent=75 // pred_region
          %s946 = sand.u32 %s153, 1
          %s947 = scalar_lea.sflag [#allocation5], %s946
          %s948 = sand.u32 %s153, 1
          %s949 = smul.addr %s948, 128
          %s950 = scalar_lea.vmem [#allocation11], %s949
          %951 = dma.done %s947, 2048
        $region80: #{tpu_custom_call.1} parent=75 // pred_fallthru
          _
      $region76: #{tpu_custom_call.1} parent=5 // pred_fallthru
        _
    $region6: #{tpu_custom_call.1} parent=1 // loop_footer
      %s24 = sadd.s32 1, %s20
    $region7: #{tpu_custom_call.1} parent=1 // loop_footer_branch
      %19 = sbr.rel target = $region3
    $region8: #{tpu_custom_call.1} parent=1 // loop_exit
      _
    %952 = vsyncpa [#allocation4], 1
    %s953 = scalar_lea.sflag [#allocation4], 1
    %954 = vsyncpa %s953, 1
    %955 = vsyncpa [#allocation7], 1
    %s956 = scalar_lea.sflag [#allocation7], 1
    %957 = vsyncpa %s956, 1
    %958 = vsyncpa [#allocation10], 1
    %959 = vsyncpa [#allocation5], 1
    %s960 = scalar_lea.sflag [#allocation5], 1
    %961 = vsyncpa %s960, 1

</llo_original>
